<compile_context>
chip_gen: v5e
topology: v5e:2x2
jax: 0.10.0
libtpu: 0.0.40
codegen_flags: <defaults>
</compile_context>

<pallas_src>
import jax
import jax.numpy as jnp
from jax.experimental import pallas as pl
from jax.experimental.pallas import tpu as pltpu


def _round_up(x, m):
    return (x + m - 1) // m * m


# ---------------------------------------------------------------------------
# Pallas kernel: fused edge-length + |d_out - d_gt| + validity masking
# ---------------------------------------------------------------------------
def _edge_loss_kernel(x_ref, o_ref):
    """x_ref: (1, 21, tf) f32 stacked gathered data; o_ref: (1, 3, tf) f32.

    Row layout of x (sublane axis):
      0:3   vertex-a coord_out (x,y,z)     3:6   vertex-a coord_gt    6:7  valid_a
      7:10  vertex-b coord_out             10:13 vertex-b coord_gt    13:14 valid_b
      14:17 vertex-c coord_out             17:20 vertex-c coord_gt    20:21 valid_c
    """
    x = x_ref[...]                                   # (1, 21, tf)

    ao, ag, va = x[:, 0:3, :], x[:, 3:6, :], x[:, 6:7, :]
    bo, bg, vb = x[:, 7:10, :], x[:, 10:13, :], x[:, 13:14, :]
    co, cg, vc = x[:, 14:17, :], x[:, 17:20, :], x[:, 20:21, :]

    def dist(p, q):
        d = p - q                                                 # (1, 3, tf)
        return jnp.sqrt(jnp.sum(d * d, axis=1, keepdims=True))    # (1, 1, tf)

    r1 = jnp.abs(dist(ao, bo) - dist(ag, bg)) * (va * vb)
    r2 = jnp.abs(dist(ao, co) - dist(ag, cg)) * (va * vc)
    r3 = jnp.abs(dist(bo, co) - dist(bg, cg)) * (vb * vc)

    # One full-tile store (avoids three masked partial-sublane stores).
    o_ref[...] = jnp.concatenate([r1, r2, r3], axis=1)            # (1, 3, tf)


# ---------------------------------------------------------------------------
# Wrapper: stacked gather (XLA), lane-dense layout, tiled pallas_call
# ---------------------------------------------------------------------------
def edge_length_loss(coord_out, coord_gt, valid, face, *, max_tile_faces=8192):
    """coord_out/coord_gt: (B, V, 3); valid: (B, V, 1); face: (F, 3) int.

    Returns (B, 3*F, 1) f32, matching torch.cat((diff1, diff2, diff3), dim=1).
    """
    coord_out = coord_out.astype(jnp.float32)
    coord_gt = coord_gt.astype(jnp.float32)
    valid = valid.astype(jnp.float32)
    face = jnp.asarray(face, jnp.int32)

    B, V, C = coord_out.shape
    assert C == 3, "coordinates must be 3-D points"
    F = face.shape[0]
    ia, ib, ic = face[:, 0], face[:, 1], face[:, 2]

    # Single lane-dense source (B, 7, V): [coord_out xyz | coord_gt xyz | valid].
    src = jnp.concatenate(
        [jnp.transpose(coord_out, (0, 2, 1)),   # (B, 3, V)
         jnp.transpose(coord_gt, (0, 2, 1)),    # (B, 3, V)
         jnp.transpose(valid, (0, 2, 1))],      # (B, 1, V)
        axis=1,
    )

    # TODO(synk): the data-dependent face-index gather stays in XLA; an
    # in-kernel lane-axis gather of arbitrary int indices has no clean,
    # reliably-lowering Pallas TPU equivalent.
    stacked = jnp.concatenate(
        [jnp.take(src, ia, axis=2),             # vertex a: rows 0..6
         jnp.take(src, ib, axis=2),             # vertex b: rows 7..13
         jnp.take(src, ic, axis=2)],            # vertex c: rows 14..20
        axis=1,
    )                                           # (B, 21, F)

    # Pad the face axis to a lane-aligned multiple of the tile size.
    # Padded faces have zero coords / zero masks -> zero loss, sliced off below.
    tf = min(max_tile_faces, _round_up(F, 128))
    F_pad = _round_up(F, tf)
    if F_pad != F:
        stacked = jnp.pad(stacked, ((0, 0), (0, 0), (0, F_pad - F)))

    nf = F_pad // tf

    out = pl.pallas_call(
        _edge_loss_kernel,
        out_shape=jax.ShapeDtypeStruct((B, 3, F_pad), jnp.float32),
        grid_spec=pltpu.PrefetchScalarGridSpec(
            num_scalar_prefetch=0,
            grid=(B, nf),
            in_specs=[pl.BlockSpec((1, 21, tf), lambda b, j: (b, 0, j))],
            out_specs=pl.BlockSpec((1, 3, tf), lambda b, j: (b, 0, j)),
        ),
        compiler_params=pltpu.CompilerParams(
            dimension_semantics=("parallel", "parallel"),
        ),
    )(stacked)

    # Row-major reshape of (B, 3, F) == torch.cat((diff1, diff2, diff3), dim=1).
    return out[:, :, :F].reshape(B, 3 * F, 1)


# ---------------------------------------------------------------------------
# Pure-JAX reference (mirrors the PyTorch forward exactly)
# ---------------------------------------------------------------------------
def edge_length_loss_ref(coord_out, coord_gt, valid, face):
    a, b, c = face[:, 0], face[:, 1], face[:, 2]

    def d(x, i, j):
        return jnp.sqrt(jnp.sum((x[:, i, :] - x[:, j, :]) ** 2, axis=2, keepdims=True))

    d1o, d2o, d3o = d(coord_out, a, b), d(coord_out, a, c), d(coord_out, b, c)
    d1g, d2g, d3g = d(coord_gt, a, b), d(coord_gt, a, c), d(coord_gt, b, c)
    m1 = valid[:, a, :] * valid[:, b, :]
    m2 = valid[:, a, :] * valid[:, c, :]
    m3 = valid[:, b, :] * valid[:, c, :]
    return jnp.concatenate(
        [jnp.abs(d1o - d1g) * m1, jnp.abs(d2o - d2g) * m2, jnp.abs(d3o - d3g) * m3],
        axis=1,
    )


# ---------------------------------------------------------------------------
if __name__ == "__main__":
    key = jax.random.PRNGKey(0)
    k1, k2, k3, k4 = jax.random.split(key, 4)

    B, V, F = 2, 64, 50  # small shapes consistent with the module
    coord_out = jax.random.normal(k1, (B, V, 3), dtype=jnp.float32)
    coord_gt = jax.random.normal(k2, (B, V, 3), dtype=jnp.float32)
    valid = (jax.random.uniform(k3, (B, V, 1)) > 0.3).astype(jnp.float32)
    face = jax.random.randint(k4, (F, 3), 0, V, dtype=jnp.int32)

    loss = edge_length_loss(coord_out, coord_gt, valid, face)
    jax.block_until_ready(loss)
    assert loss.shape == (B, 3 * F, 1), loss.shape

    ref = edge_length_loss_ref(coord_out, coord_gt, valid, face)
    max_err = float(jnp.max(jnp.abs(loss - ref)))
    assert jnp.allclose(loss, ref, atol=1e-5, rtol=1e-5), max_err

    print("KERNEL_OK")
</pallas_src>

<mosaic_0001>
module attributes {stable_mosaic.version = 11 : i64} {
  func.func @_edge_loss_kernel(%arg0: i32, %arg1: i32, %arg2: memref<1x21x128xf32, #tpu.memory_space<vmem>>, %arg3: memref<1x3x128xf32, #tpu.memory_space<vmem>>) attributes {dimension_semantics = [#tpu.dimension_semantics<parallel>, #tpu.dimension_semantics<parallel>], iteration_bounds = array<i64: 2, 1>, scalar_prefetch = 0 : i64, scratch_operands = 0 : i64, tpu.core_type = #tpu.core_type<tc>, window_params = [{transform_indices = @transform_0, window_bounds = array<i64: 1, 21, 128>}, {transform_indices = @transform_1, window_bounds = array<i64: 1, 3, 128>}]} {
    %c0 = arith.constant 0 : index
    %c0_0 = arith.constant 0 : index
    %c0_1 = arith.constant 0 : index
    %0 = vector.load %arg2[%c0, %c0_0, %c0_1] : memref<1x21x128xf32, #tpu.memory_space<vmem>>, vector<1x21x128xf32>
    %1 = vector.extract_strided_slice %0 {offsets = [0, 0, 0], sizes = [1, 3, 128], strides = [1, 1, 1]} : vector<1x21x128xf32> to vector<1x3x128xf32>
    %2 = vector.extract_strided_slice %0 {offsets = [0, 3, 0], sizes = [1, 3, 128], strides = [1, 1, 1]} : vector<1x21x128xf32> to vector<1x3x128xf32>
    %3 = vector.extract_strided_slice %0 {offsets = [0, 6, 0], sizes = [1, 1, 128], strides = [1, 1, 1]} : vector<1x21x128xf32> to vector<1x1x128xf32>
    %4 = vector.extract_strided_slice %0 {offsets = [0, 7, 0], sizes = [1, 3, 128], strides = [1, 1, 1]} : vector<1x21x128xf32> to vector<1x3x128xf32>
    %5 = vector.extract_strided_slice %0 {offsets = [0, 10, 0], sizes = [1, 3, 128], strides = [1, 1, 1]} : vector<1x21x128xf32> to vector<1x3x128xf32>
    %6 = vector.extract_strided_slice %0 {offsets = [0, 13, 0], sizes = [1, 1, 128], strides = [1, 1, 1]} : vector<1x21x128xf32> to vector<1x1x128xf32>
    %7 = vector.extract_strided_slice %0 {offsets = [0, 14, 0], sizes = [1, 3, 128], strides = [1, 1, 1]} : vector<1x21x128xf32> to vector<1x3x128xf32>
    %8 = vector.extract_strided_slice %0 {offsets = [0, 17, 0], sizes = [1, 3, 128], strides = [1, 1, 1]} : vector<1x21x128xf32> to vector<1x3x128xf32>
    %9 = vector.extract_strided_slice %0 {offsets = [0, 20, 0], sizes = [1, 1, 128], strides = [1, 1, 1]} : vector<1x21x128xf32> to vector<1x1x128xf32>
    %10 = arith.subf %1, %4 : vector<1x3x128xf32>
    %11 = arith.mulf %10, %10 : vector<1x3x128xf32>
    %cst = arith.constant dense<0.000000e+00> : vector<1x128xf32>
    %12 = vector.multi_reduction <add>, %11, %cst [1] : vector<1x3x128xf32> to vector<1x128xf32>
    %13 = vector.shape_cast %12 : vector<1x128xf32> to vector<1x1x128xf32>
    %14 = math.sqrt %13 : vector<1x1x128xf32>
    %15 = arith.subf %2, %5 : vector<1x3x128xf32>
    %16 = arith.mulf %15, %15 : vector<1x3x128xf32>
    %cst_2 = arith.constant dense<0.000000e+00> : vector<1x128xf32>
    %17 = vector.multi_reduction <add>, %16, %cst_2 [1] : vector<1x3x128xf32> to vector<1x128xf32>
    %18 = vector.shape_cast %17 : vector<1x128xf32> to vector<1x1x128xf32>
    %19 = math.sqrt %18 : vector<1x1x128xf32>
    %20 = arith.subf %14, %19 : vector<1x1x128xf32>
    %21 = math.absf %20 : vector<1x1x128xf32>
    %22 = arith.mulf %3, %6 : vector<1x1x128xf32>
    %23 = arith.mulf %21, %22 : vector<1x1x128xf32>
    %24 = arith.subf %1, %7 : vector<1x3x128xf32>
    %25 = arith.mulf %24, %24 : vector<1x3x128xf32>
    %cst_3 = arith.constant dense<0.000000e+00> : vector<1x128xf32>
    %26 = vector.multi_reduction <add>, %25, %cst_3 [1] : vector<1x3x128xf32> to vector<1x128xf32>
    %27 = vector.shape_cast %26 : vector<1x128xf32> to vector<1x1x128xf32>
    %28 = math.sqrt %27 : vector<1x1x128xf32>
    %29 = arith.subf %2, %8 : vector<1x3x128xf32>
    %30 = arith.mulf %29, %29 : vector<1x3x128xf32>
    %cst_4 = arith.constant dense<0.000000e+00> : vector<1x128xf32>
    %31 = vector.multi_reduction <add>, %30, %cst_4 [1] : vector<1x3x128xf32> to vector<1x128xf32>
    %32 = vector.shape_cast %31 : vector<1x128xf32> to vector<1x1x128xf32>
    %33 = math.sqrt %32 : vector<1x1x128xf32>
    %34 = arith.subf %28, %33 : vector<1x1x128xf32>
    %35 = math.absf %34 : vector<1x1x128xf32>
    %36 = arith.mulf %3, %9 : vector<1x1x128xf32>
    %37 = arith.mulf %35, %36 : vector<1x1x128xf32>
    %38 = arith.subf %4, %7 : vector<1x3x128xf32>
    %39 = arith.mulf %38, %38 : vector<1x3x128xf32>
    %cst_5 = arith.constant dense<0.000000e+00> : vector<1x128xf32>
    %40 = vector.multi_reduction <add>, %39, %cst_5 [1] : vector<1x3x128xf32> to vector<1x128xf32>
    %41 = vector.shape_cast %40 : vector<1x128xf32> to vector<1x1x128xf32>
    %42 = math.sqrt %41 : vector<1x1x128xf32>
    %43 = arith.subf %5, %8 : vector<1x3x128xf32>
    %44 = arith.mulf %43, %43 : vector<1x3x128xf32>
    %cst_6 = arith.constant dense<0.000000e+00> : vector<1x128xf32>
    %45 = vector.multi_reduction <add>, %44, %cst_6 [1] : vector<1x3x128xf32> to vector<1x128xf32>
    %46 = vector.shape_cast %45 : vector<1x128xf32> to vector<1x1x128xf32>
    %47 = math.sqrt %46 : vector<1x1x128xf32>
    %48 = arith.subf %42, %47 : vector<1x1x128xf32>
    %49 = math.absf %48 : vector<1x1x128xf32>
    %50 = arith.mulf %6, %9 : vector<1x1x128xf32>
    %51 = arith.mulf %49, %50 : vector<1x1x128xf32>
    %52 = tpu.concatenate %23, %37, %51 in 1 : vector<1x1x128xf32>, vector<1x1x128xf32>, vector<1x1x128xf32> -> vector<1x3x128xf32>
    %c0_7 = arith.constant 0 : index
    %c0_8 = arith.constant 0 : index
    %c0_9 = arith.constant 0 : index
    %53 = vector.load %arg3[%c0_7, %c0_8, %c0_9] : memref<1x3x128xf32, #tpu.memory_space<vmem>>, vector<1x3x128xf32>
    tpu.vector_store %arg3[%c0_7, %c0_8, %c0_9], %52 {strides = array<i32>} : memref<1x3x128xf32, #tpu.memory_space<vmem>>, vector<1x3x128xf32>,
    return
  }
  func.func @transform_0(%arg0: i32, %arg1: i32) -> (i32, i32, i32) {
    %c0_i32 = arith.constant 0 : i32
    %c0_i32_0 = arith.constant 0 : i32
    return %arg0, %c0_i32, %arg1 : i32, i32, i32
  }
  func.func @transform_1(%arg0: i32, %arg1: i32) -> (i32, i32, i32) {
    %c0_i32 = arith.constant 0 : i32
    %c0_i32_0 = arith.constant 0 : i32
    return %arg0, %c0_i32, %arg1 : i32, i32, i32
  }
}

</mosaic_0001>

<llo_original>
// kernel: tpu_custom_call.1
$region0: #{tpu_custom_call.1}
  #allocation0 [shape = 'u32[]', space=smem, size = 0x4, offset = 0x4, fixed_abs, tag = 'smem constant byte address 0x4 - core index']
  #allocation1 [shape = 'u32[72,128]{1,0:T(1,128)}', space=vmem, size = 0x9000, scoped, tag = 'internal scratch']
  %s0 = inlined_call_operand.vmem [shape: f32[2,21,128], index: 0, kind: input, shape index: {}]
  %s1 = inlined_call_operand.vmem [shape: f32[2,3,128], index: 1, kind: output, shape index: {}]
  %s2 = sld [smem:[#allocation0]]
  $region37: #{tpu_custom_call.1} parent=0
    _
  %s4 = ssub.s32 1, %s2
  %s5 = scalar_select 0, %s4, %s2
  loop: start=0, step=1, limit=4
  $region2: #{tpu_custom_call.1} parent=0 // loop_pre_header
    _
  $region3: #{tpu_custom_call.1} parent=0 // loop_header
    %s7 = sphi 0, %s11
    %p8 = scmp.ge.s32.totalorder %s7, 4
    %s14 = sphi 0, %s26
    %s15 = sphi 0, %s22
    %s16 = sphi 0, %s14
    %s17 = sphi 0, %s15
    %s18 = sphi 0, %s16
    %s19 = sphi 0, %s17
    %s31 = sphi 0, %s33
    %s34 = sphi 0, %s31
    %s35 = sphi 0, %s34
    %s51 = sphi 0, %s35
    %s59 = sphi 0, %s61
    %s62 = sphi 0, %s59
    %s63 = sphi 0, %s62
    %s79 = sphi 0, %s63
  $region4: #{tpu_custom_call.1} parent=0 // loop_header_branch
    %10 = sbr.rel (%p8) target = $region8
  $region5: #{tpu_custom_call.1} parent=0 // loop_body
    %s12 = ssub.s32 %s7, 1
    %s13 = ssub.s32 %s7, 2
    %s20 = sadd.s32 1, %s15
    %p21 = scmp.ge.s32.totalorder %s20, 1
    %s22 = scalar_select %p21, 0, %s20
    %s23 = sadd.s32 1, %s14
    %s24 = scalar_select %p21, %s23, %s14
    %p25 = scmp.ge.s32.totalorder %s24, 2
    %s26 = scalar_select %p25, 0, %s24
    %s27 = ssub.s32 %s14, %s26
    %s28 = ssub.s32 %s15, %s22
    %s29 = sor.u32 %s27, %s28
    %p30 = scmp.eq.s32.totalorder %s29, 0
    %s32 = sadd.s32 %s31, 1
    %s33 = scalar_select %p30, %s31, %s32
    %p36 = pneg %p30
    %p37 = scmp.eq.s32.totalorder %s7, 1
    %p38 = por %p36, %p37
    %p39 = scmp.ne.s32.totalorder %s31, %s34
    %p40 = scmp.eq.s32.totalorder %s7, 0
    %p41 = por %p39, %p40
    %p42 = scmp.ne.s32.totalorder %s31, %s34
    %p43 = scmp.eq.s32.totalorder %s12, 1
    %p44 = por %p42, %p43
    %p45 = scmp.ne.s32.totalorder %s34, %s35
    %p46 = scmp.eq.s32.totalorder %s12, 0
    %p47 = por %p45, %p46
    %p48 = scmp.ne.s32.totalorder %s34, %s35
    %p49 = scmp.eq.s32.totalorder %s13, 1
    %p50 = por %p48, %p49
    %p52 = scmp.ne.s32.totalorder %s35, %s51
    %p53 = scmp.eq.s32.totalorder %s13, 0
    %p54 = por %p52, %p53
    %s55 = ssub.s32 %s14, %s26
    %s56 = ssub.s32 %s15, %s22
    %s57 = sor.u32 %s55, %s56
    %p58 = scmp.eq.s32.totalorder %s57, 0
    %s60 = sadd.s32 %s59, 1
    %s61 = scalar_select %p58, %s59, %s60
    %p64 = pneg %p58
    %p65 = scmp.eq.s32.totalorder %s7, 1
    %p66 = por %p64, %p65
    %p67 = scmp.ne.s32.totalorder %s59, %s62
    %p68 = scmp.eq.s32.totalorder %s7, 0
    %p69 = por %p67, %p68
    %p70 = scmp.ne.s32.totalorder %s59, %s62
    %p71 = scmp.eq.s32.totalorder %s12, 1
    %p72 = por %p70, %p71
    %p73 = scmp.ne.s32.totalorder %s62, %s63
    %p74 = scmp.eq.s32.totalorder %s12, 0
    %p75 = por %p73, %p74
    %p76 = scmp.ne.s32.totalorder %s62, %s63
    %p77 = scmp.eq.s32.totalorder %s13, 1
    %p78 = por %p76, %p77
    %p80 = scmp.ne.s32.totalorder %s63, %s79
    %p81 = scmp.eq.s32.totalorder %s13, 0
    %p82 = por %p80, %p81
    %p83 = scmp.le.s32.totalorder 1, %s7
    %p84 = scmp.lt.s32.totalorder %s7, 3
    %p85 = pnand %p83, %p84
    %p86 = pneg %p85
    // Predicated region
    $region9: #{tpu_custom_call.1} parent=5 // pred_check
      _
    $region10: #{tpu_custom_call.1} parent=5 // pred_check_branch
      %88 = sbr.rel (%p85) target = $region12
    $region11: #{tpu_custom_call.1} parent=5 // pred_region
      %s89 = ssub.s32 %s7, 1
    $region12: #{tpu_custom_call.1} parent=5 // pred_fallthru
      _
    %p90 = scmp.lt.s32.totalorder %s7, 2
    // Predicated region
    $region13: #{tpu_custom_call.1} parent=5 // pred_check
      %p91 = pneg %p90
    $region14: #{tpu_custom_call.1} parent=5 // pred_check_branch
      %93 = sbr.rel (%p91) target = $region16
    $region15: #{tpu_custom_call.1} parent=5 // pred_region
      // Predicated region
      $region17: #{tpu_custom_call.1} parent=15 // pred_check
        %p94 = pneg %p41
      $region18: #{tpu_custom_call.1} parent=15 // pred_check_branch
        %96 = sbr.rel (%p94) target = $region20
      $region19: #{tpu_custom_call.1} parent=15 // pred_region
        %p97 = scmp.lt.s32.totalorder %s14, 1
        %s98 = scalar_select %p97, %s14, 1
        %p99 = scmp.lt.s32.totalorder %s15, 0
        %s100 = scalar_select %p99, %s15, 0
        %s101 = smul.addr %s98, 3
        %s102 = sadd.s32 %s100, %s101
        %s103 = smul.addr %s102, 8
        %s104 = scalar_lea.vmem %s0, %s103
      $region20: #{tpu_custom_call.1} parent=15 // pred_fallthru
        _
    $region16: #{tpu_custom_call.1} parent=5 // pred_fallthru
      _
    %p105 = scmp.le.s32.totalorder 1, %s7
    %p106 = scmp.lt.s32.totalorder %s7, 3
    %p107 = pnand %p105, %p106
    %p108 = pneg %p107
    // Predicated region
    $region21: #{tpu_custom_call.1} parent=5 // pred_check
      _
    $region22: #{tpu_custom_call.1} parent=5 // pred_check_branch
      %110 = sbr.rel (%p107) target = $region24
    $region23: #{tpu_custom_call.1} parent=5 // pred_region
      %s111 = ssub.s32 %s7, 1
      %p112 = scmp.lt.s32.totalorder %s16, 1
      %s113 = scalar_select %p112, %s16, 1
      %p114 = scmp.lt.s32.totalorder %s17, 0
      %s115 = scalar_select %p114, %s17, 0
      %s116 = smul.addr %s113, 3
      %s117 = sadd.s32 %s115, %s116
      %s118 = smul.addr %s117, 8
      %s119 = scalar_lea.vmem %s0, %s118
      %p120 = pneg %p47
      %p121 = pneg %p44
      %p122 = pneg %p75
      %p123 = pneg %p72
      %p124 = scmp.lt.s32.totalorder %s16, 1
      %s125 = scalar_select %p124, %s16, 1
      %p126 = scmp.lt.s32.totalorder %s17, 0
      %s127 = scalar_select %p126, %s17, 0
      %s128 = sadd.s32 %s127, %s125
      %s129 = smul.addr %s128, 4
      %s130 = scalar_lea.vmem %s1, %s129
      %p131 = scmp.lt.s32.totalorder %s16, 1
      %s132 = scalar_select %p131, %s16, 1
      %p133 = scmp.lt.s32.totalorder %s17, 0
      %s134 = scalar_select %p133, %s17, 0
      %s135 = smul.addr %s132, 3
      %s136 = sadd.s32 %s134, %s135
      %s137 = smul.addr %s136, 8
      %s138 = scalar_lea.vmem %s0, %s137
      %p139 = scmp.lt.s32.totalorder %s16, 1
      %s140 = scalar_select %p139, %s16, 1
      %p141 = scmp.lt.s32.totalorder %s17, 0
      %s142 = scalar_select %p141, %s17, 0
      %s143 = sadd.s32 %s142, %s140
      %s144 = smul.addr %s143, 4
      %s145 = scalar_lea.vmem %s1, %s144
      %v146 = vld [vmem:[%s138] sm:$0xff]
      %v147 = vld [vmem:[%s138 + $0x8] sm:$0xff]
      %v148 = vld [vmem:[%s138 + $0x10] sm:$0x1f]
      %vm151 = vcmask 1040384
      %v152 = vrot.slane %v146, 7
      %v153 = vrot.slane %v147, 7
      %v154 = vsel %vm151, %v152, %v153
      %v156 = vsub.f32 %v146, %v154
      %v157 = vmul.f32 %v156, %v156
      %vm158 = vcmask 1042432
      %v159 = vsel %vm158, %v157, 0.0
      %v160 = vrot.slane %v159, 4
      %v161 = vadd.f32 %v159, %v160
      %v162 = vrot.slane %v161, 2
      %v163 = vadd.f32 %v161, %v162
      %v164 = vrot.slane %v163, 1
      %v165 = vadd.f32 %v163, %v164
      %v166 = vrsqrt.pop %v165
      %v167 = vmul.f32 %v166, %v165
      %v168 = vmul.f32 %v167, %v166
      %v169 = vmul.f32 0.5, %v168
      %v170 = vsub.f32 1.5, %v169
      %v171 = vmul.f32 %v166, %v170
      %v172 = vmul.f32 %v165, %v171
      %vm173 = vcmp.eq.f32.partialorder %v165, inf
      %v174 = vsel %vm173, %v165, %v172
      %vm175 = vcmp.eq.f32.partialorder %v165, 0.0
      %v176 = vand.u32 %v165, 2147483648
      %v177 = vsel %vm175, %v176, %v174
      %v179 = vsub.f32 %v146, %v153
      %v180 = vmul.f32 %v179, %v179
      %v182 = vrot.slane %v180, 3
      %v184 = vsel %vm158, %v182, 0.0
      %v185 = vrot.slane %v184, 4
      %v186 = vadd.f32 %v184, %v185
      %v187 = vrot.slane %v186, 2
      %v188 = vadd.f32 %v186, %v187
      %v189 = vrot.slane %v188, 1
      %v190 = vadd.f32 %v188, %v189
      %v191 = vrsqrt.pop %v190
      %v192 = vmul.f32 %v191, %v190
      %v193 = vmul.f32 %v192, %v191
      %v194 = vmul.f32 0.5, %v193
      %v195 = vsub.f32 1.5, %v194
      %v196 = vmul.f32 %v191, %v195
      %v197 = vmul.f32 %v190, %v196
      %vm198 = vcmp.eq.f32.partialorder %v190, inf
      %v199 = vsel %vm198, %v190, %v197
      %vm200 = vcmp.eq.f32.partialorder %v190, 0.0
      %v201 = vand.u32 %v190, 2147483648
      %v202 = vsel %vm200, %v201, %v199
      %v203 = vsub.f32 %v177, %v202
      %v204 = vand.u32 2147483647, %v203
      %v205 = vmul.f32 %v146, %v153
      %v206 = vmul.f32 %v204, %v205
      %vm208 = vcmask 1041408
      %v209 = vrot.slane %v147, 6
      %v210 = vrot.slane %v148, 6
      %v211 = vsel %vm208, %v209, %v210
      %v213 = vsub.f32 %v146, %v211
      %v214 = vmul.f32 %v213, %v213
      %v215 = vsel %vm158, %v214, 0.0
      %v216 = vrot.slane %v215, 4
      %v217 = vadd.f32 %v215, %v216
      %v218 = vrot.slane %v217, 2
      %v219 = vadd.f32 %v217, %v218
      %v220 = vrot.slane %v219, 1
      %v221 = vadd.f32 %v219, %v220
      %v222 = vrsqrt.pop %v221
      %v223 = vmul.f32 %v222, %v221
      %v224 = vmul.f32 %v223, %v222
      %v225 = vmul.f32 0.5, %v224
      %v226 = vsub.f32 1.5, %v225
      %v227 = vmul.f32 %v222, %v226
      %v228 = vmul.f32 %v221, %v227
      %vm229 = vcmp.eq.f32.partialorder %v221, inf
      %v230 = vsel %vm229, %v221, %v228
      %vm231 = vcmp.eq.f32.partialorder %v221, 0.0
      %v232 = vand.u32 %v221, 2147483648
      %v233 = vsel %vm231, %v232, %v230
      %v235 = vsub.f32 %v146, %v210
      %v236 = vmul.f32 %v235, %v235
      %v238 = vrot.slane %v236, 3
      %v240 = vsel %vm158, %v238, 0.0
      %v241 = vrot.slane %v240, 4
      %v242 = vadd.f32 %v240, %v241
      %v243 = vrot.slane %v242, 2
      %v244 = vadd.f32 %v242, %v243
      %v245 = vrot.slane %v244, 1
      %v246 = vadd.f32 %v244, %v245
      %v247 = vrsqrt.pop %v246
      %v248 = vmul.f32 %v247, %v246
      %v249 = vmul.f32 %v248, %v247
      %v250 = vmul.f32 0.5, %v249
      %v251 = vsub.f32 1.5, %v250
      %v252 = vmul.f32 %v247, %v251
      %v253 = vmul.f32 %v246, %v252
      %vm254 = vcmp.eq.f32.partialorder %v246, inf
      %v255 = vsel %vm254, %v246, %v253
      %vm256 = vcmp.eq.f32.partialorder %v246, 0.0
      %v257 = vand.u32 %v246, 2147483648
      %v258 = vsel %vm256, %v257, %v255
      %v259 = vsub.f32 %v233, %v258
      %v260 = vand.u32 2147483647, %v259
      %v261 = vmul.f32 %v146, %v210
      %v262 = vmul.f32 %v260, %v261
      %v263 = vrot.slane %v148, 7
      %v264 = vsel %vm151, %v153, %v263
      %v266 = vsub.f32 %v147, %v264
      %v267 = vmul.f32 %v266, %v266
      %v269 = vrot.slane %v180, 7
      %v270 = vrot.slane %v267, 7
      %v271 = vsel %vm151, %v269, %v270
      %v273 = vsel %vm158, %v271, 0.0
      %v274 = vrot.slane %v273, 4
      %v275 = vadd.f32 %v273, %v274
      %v276 = vrot.slane %v275, 2
      %v277 = vadd.f32 %v275, %v276
      %v278 = vrot.slane %v277, 1
      %v279 = vadd.f32 %v277, %v278
      %v280 = vrsqrt.pop %v279
      %v281 = vmul.f32 %v280, %v279
      %v282 = vmul.f32 %v281, %v280
      %v283 = vmul.f32 0.5, %v282
      %v284 = vsub.f32 1.5, %v283
      %v285 = vmul.f32 %v280, %v284
      %v286 = vmul.f32 %v279, %v285
      %vm287 = vcmp.eq.f32.partialorder %v279, inf
      %v288 = vsel %vm287, %v279, %v286
      %vm289 = vcmp.eq.f32.partialorder %v279, 0.0
      %v290 = vand.u32 %v279, 2147483648
      %v291 = vsel %vm289, %v290, %v288
      %v293 = vsub.f32 %v147, %v263
      %v294 = vmul.f32 %v293, %v293
      %v296 = vrot.slane %v294, 2
      %v298 = vsel %vm158, %v296, 0.0
      %v299 = vrot.slane %v298, 4
      %v300 = vadd.f32 %v298, %v299
      %v301 = vrot.slane %v300, 2
      %v302 = vadd.f32 %v300, %v301
      %v303 = vrot.slane %v302, 1
      %v304 = vadd.f32 %v302, %v303
      %v305 = vrsqrt.pop %v304
      %v306 = vmul.f32 %v305, %v304
      %v307 = vmul.f32 %v306, %v305
      %v308 = vmul.f32 0.5, %v307
      %v309 = vsub.f32 1.5, %v308
      %v310 = vmul.f32 %v305, %v309
      %v311 = vmul.f32 %v304, %v310
      %vm312 = vcmp.eq.f32.partialorder %v304, inf
      %v313 = vsel %vm312, %v304, %v311
      %vm314 = vcmp.eq.f32.partialorder %v304, 0.0
      %v315 = vand.u32 %v304, 2147483648
      %v316 = vsel %vm314, %v315, %v313
      %v317 = vsub.f32 %v291, %v316
      %v318 = vand.u32 2147483647, %v317
      %v319 = vmul.f32 %v147, %v263
      %v320 = vmul.f32 %v318, %v319
      %v322 = vrot.slane %v206, 6
      %v325 = vrot.slane %v262, 5
      %v328 = vrot.slane %v320, 3
      %v330 = vsel %vm151, %v322, %v325
      %v331 = vsel %vm208, %v330, %v328
      %332 = vst [vmem:[%s145] sm:$0x7] %v331
      %p333 = scmp.lt.s32.totalorder %s16, 1
      %s334 = scalar_select %p333, %s16, 1
      %p335 = scmp.lt.s32.totalorder %s17, 0
      %s336 = scalar_select %p335, %s17, 0
      %s337 = sadd.s32 %s336, %s334
      %s338 = smul.addr %s337, 4
      %s339 = scalar_lea.vmem %s1, %s338
      // Predicated region
      $region25: #{tpu_custom_call.1} parent=23 // pred_check
        %p340 = pneg %p72
      $region26: #{tpu_custom_call.1} parent=23 // pred_check_branch
        %342 = sbr.rel (%p340) target = $region28
      $region27: #{tpu_custom_call.1} parent=23 // pred_region
        _
      $region28: #{tpu_custom_call.1} parent=23 // pred_fallthru
        _
    $region24: #{tpu_custom_call.1} parent=5 // pred_fallthru
      _
    %p343 = scmp.le.s32.totalorder 2, %s7
    // Predicated region
    $region29: #{tpu_custom_call.1} parent=5 // pred_check
      %p344 = pneg %p343
    $region30: #{tpu_custom_call.1} parent=5 // pred_check_branch
      %346 = sbr.rel (%p344) target = $region32
    $region31: #{tpu_custom_call.1} parent=5 // pred_region
      %s347 = ssub.s32 %s7, 2
      // Predicated region
      $region33: #{tpu_custom_call.1} parent=31 // pred_check
        %p348 = pneg %p78
      $region34: #{tpu_custom_call.1} parent=31 // pred_check_branch
        %350 = sbr.rel (%p348) target = $region36
      $region35: #{tpu_custom_call.1} parent=31 // pred_region
        %p351 = scmp.lt.s32.totalorder %s18, 1
        %s352 = scalar_select %p351, %s18, 1
        %p353 = scmp.lt.s32.totalorder %s19, 0
        %s354 = scalar_select %p353, %s19, 0
        %s355 = sadd.s32 %s354, %s352
        %s356 = smul.addr %s355, 4
        %s357 = scalar_lea.vmem %s1, %s356
      $region36: #{tpu_custom_call.1} parent=31 // pred_fallthru
        _
    $region32: #{tpu_custom_call.1} parent=5 // pred_fallthru
      _
  $region6: #{tpu_custom_call.1} parent=0 // loop_footer
    %s11 = sadd.s32 1, %s7
  $region7: #{tpu_custom_call.1} parent=0 // loop_footer_branch
    %6 = sbr.rel target = $region3
  $region8: #{tpu_custom_call.1} parent=0 // loop_exit
    _

</llo_original>
